<compile_context>
chip_gen: v7x
topology: tpu7x:2x2x1
jax: 0.10.0
libtpu: 0.0.40
codegen_flags: <defaults>
</compile_context>

<pallas_src>
import jax
import jax.numpy as jnp
import numpy as np
from jax.experimental import pallas as pl
from jax.experimental.pallas import tpu as pltpu

LANE = 128
BN_EPS = 1e-5


def _round_up(n, m):
    return ((n + m - 1) // m) * m


def _full_spec(shape):
    # whole-array block (no grid): last two dims equal the full array dims,
    # which satisfies the TPU tiling constraint.
    return pl.BlockSpec(shape, lambda: (0,) * len(shape))


# ------------------------------ fused kernel -------------------------------

def _make_fused_kernel(B, L, K, n_hidden, Cp, Hp, Op, lp_stride, lo_stride):
    """Fused kernel: all heads, all stages, activations resident in VMEM."""
    p = K // 2

    def kernel(*refs):
        x_ref = refs[0]                          # (B*lp_stride, Cp)   bf16
        hidden = refs[1:1 + 3 * n_hidden]        # per stage: w (K*Cin,Hp) bf16,
                                                 #   gamma (1,Hp) f32, beta (1,Hp) f32
        wf_ref = refs[1 + 3 * n_hidden]          # (K*Hp, Op)          bf16
        bf_ref = refs[2 + 3 * n_hidden]          # (1, Op)             f32
        o_ref = refs[3 + 3 * n_hidden]           # (B*L, Op)           f32
        acc_ref = refs[4 + 3 * n_hidden]         # (B*lo_stride, Hp)   f32
        col_ref = refs[5 + 3 * n_hidden]         # (B*lo_stride, K*max(Cp,Hp)) bf16
        hpad_ref = refs[6 + 3 * n_hidden]        # (B*lp_stride, Hp)   bf16

        # ---- zero ONLY the padding rows (once; real rows rewritten each stage)
        if lo_stride > L:
            for b in range(B):
                col_ref[b * lo_stride + L:(b + 1) * lo_stride, :] = jnp.zeros(
                    (lo_stride - L, col_ref.shape[1]), col_ref.dtype)
        for b in range(B):
            hpad_ref[b * lp_stride:b * lp_stride + p, :] = jnp.zeros(
                (p, Hp), hpad_ref.dtype)
            tail = lp_stride - p - L
            if tail > 0:
                hpad_ref[b * lp_stride + p + L:(b + 1) * lp_stride, :] = jnp.zeros(
                    (tail, Hp), hpad_ref.dtype)

        def build_cols(src_ref, in_dim):
            # in-VMEM im2col: col[i, k*in_dim + c] = src[i + k, c]   (per batch)
            for b in range(B):
                for k in range(K):
                    col_ref[b * lo_stride:b * lo_stride + L,
                            k * in_dim:(k + 1) * in_dim] = \
                        src_ref[b * lp_stride + k:b * lp_stride + k + L, :]

        inv_n = 1.0 / float(B * L)
        src_ref = x_ref
        for s in range(n_hidden):
            w_ref = hidden[3 * s]
            g_ref = hidden[3 * s + 1]
            beta_ref = hidden[3 * s + 2]
            in_dim = w_ref.shape[0] // K

            # one big bf16 MXU matmul per stage (f32 accumulation)
            build_cols(src_ref, in_dim)
            acc_ref[...] = jnp.dot(col_ref[:, :K * in_dim], w_ref[...],
                                   preferred_element_type=jnp.float32)

            # train-mode BatchNorm1d over the B*L sample axis, single pass
            # (padding rows of acc are exactly zero, so sums stay correct
            #  with the 1/(B*L) denominators).  Folded into one FMA + ReLU.
            y = acc_ref[...]
            mean = jnp.sum(y, axis=0, keepdims=True) * inv_n
            ex2 = jnp.sum(y * y, axis=0, keepdims=True) * inv_n
            var = jnp.maximum(ex2 - mean * mean, 0.0)
            scale = g_ref[...] * jax.lax.rsqrt(var + BN_EPS)
            shift = beta_ref[...] - mean * scale
            h = jnp.maximum(y * scale + shift, 0.0)

            # re-pad along length inside VMEM; cast to bf16 exactly once here.
            for b in range(B):
                hpad_ref[b * lp_stride + p:b * lp_stride + p + L, :] = \
                    h[b * lo_stride:b * lo_stride + L, :].astype(hpad_ref.dtype)
            src_ref = hpad_ref

        # final conv + bias (all heads packed, lane-dense output)
        in_dim = wf_ref.shape[0] // K
        build_cols(src_ref, in_dim)
        yf = jnp.dot(col_ref[:, :K * in_dim], wf_ref[...],
                     preferred_element_type=jnp.float32) + bf_ref[...]
        for b in range(B):
            o_ref[b * L:(b + 1) * L, :] = yf[b * lo_stride:b * lo_stride + L, :]

    return kernel


# ------------------------------ param packing ------------------------------

def init_params(key, input_channels, head_channels, kernel_size, sep_head_dict,
                init_bias=-2.19):
    """Synthetic parameters in PyTorch layouts: conv w (C_out, C_in, K)."""
    params = {}
    for name, cfg in sep_head_dict.items():
        num_conv = cfg['num_conv']
        out_ch = cfg['out_channels']
        hidden = []
        c_in = input_channels
        for _ in range(num_conv - 1):
            key, k1, k2, k3 = jax.random.split(key, 4)
            w = jax.random.normal(k1, (head_channels, c_in, kernel_size),
                                  jnp.float32) / np.sqrt(c_in * kernel_size)
            gamma = 1.0 + 0.1 * jax.random.normal(k2, (head_channels,), jnp.float32)
            beta = 0.1 * jax.random.normal(k3, (head_channels,), jnp.float32)
            hidden.append((w, gamma, beta))
            c_in = head_channels
        key, k1, k2 = jax.random.split(key, 3)
        w = jax.random.normal(k1, (out_ch, c_in, kernel_size),
                              jnp.float32) / np.sqrt(c_in * kernel_size)
        if 'hm' in name:
            b = jnp.full((out_ch,), init_bias, jnp.float32)
        else:
            b = 0.1 * jax.random.normal(k2, (out_ch,), jnp.float32)
        params[name] = {'hidden': hidden, 'final': (w, b)}
    return params, key


def pack_params(params, sep_head_dict, input_channels, head_channels, kernel_size):
    """Pack all heads into lane-dense, 128-padded, im2col-ready weights."""
    names = list(sep_head_dict.keys())
    n_heads = len(names)
    n_convs = [sep_head_dict[n]['num_conv'] for n in names]
    assert len(set(n_convs)) == 1, "fused kernel expects uniform num_conv across heads"
    n_hidden = n_convs[0] - 1
    assert n_hidden >= 1
    if n_hidden > 1:
        assert input_channels == head_channels

    H = head_channels
    K = kernel_size
    Cp = _round_up(input_channels, LANE)
    Hp = _round_up(n_heads * H, LANE)
    out_ch = [sep_head_dict[n]['out_channels'] for n in names]
    offs = np.cumsum([0] + out_ch).tolist()
    Op = _round_up(max(offs[-1], 1), LANE)

    # NOTE: bf16 operands (f32 MXU accumulation) — ~1e-3 relative error vs an
    # f32 reference; acceptable for detection heads (incl. 'hm' focal-loss
    # logits), documented per review.
    # TODO(synk): for eval-mode (running-stats) BN deployments, fold BN
    # scale/shift into these conv weights/biases here and drop the in-kernel
    # mean/var reduction entirely.
    hidden_packed = []
    for s in range(n_hidden):
        in_dim = Cp if s == 0 else Hp
        w_big = np.zeros((K, in_dim, Hp), np.float32)
        g_big = np.zeros((1, Hp), np.float32)
        b_big = np.zeros((1, Hp), np.float32)
        for j, name in enumerate(names):
            w, gamma, beta = params[name]['hidden'][s]
            w_k = np.transpose(np.asarray(w), (2, 1, 0))     # (K, C_in, H)
            if s == 0:
                w_big[:, :input_channels, j * H:(j + 1) * H] = w_k
            else:
                w_big[:, j * H:(j + 1) * H, j * H:(j + 1) * H] = w_k  # block-diag
            g_big[0, j * H:(j + 1) * H] = np.asarray(gamma)
            b_big[0, j * H:(j + 1) * H] = np.asarray(beta)
        # im2col contraction layout: row index = k*in_dim + c
        hidden_packed.append((jnp.asarray(w_big.reshape(K * in_dim, Hp),
                                          dtype=jnp.bfloat16),
                              jnp.asarray(g_big), jnp.asarray(b_big)))

    wf_big = np.zeros((K, Hp, Op), np.float32)
    bf_big = np.zeros((1, Op), np.float32)
    for j, name in enumerate(names):
        w, bias = params[name]['final']
        w_k = np.transpose(np.asarray(w), (2, 1, 0))          # (K, H, out)
        wf_big[:, j * H:(j + 1) * H, offs[j]:offs[j + 1]] = w_k
        bf_big[0, offs[j]:offs[j + 1]] = np.asarray(bias)

    return {
        'hidden': hidden_packed,
        'final_w': jnp.asarray(wf_big.reshape(K * Hp, Op), dtype=jnp.bfloat16),
        'final_b': jnp.asarray(bf_big),
        'Cp': Cp, 'Hp': Hp, 'Op': Op,
        'out_offsets': offs, 'names': names, 'n_hidden': n_hidden,
    }


# ------------------------------ forward wrapper -----------------------------

def separate_head_forward(x_ncl, packed, kernel_size):
    """Fused Pallas forward.  x_ncl: (B, C_in, L) f32 -> dict name -> (B, C_out, L)."""
    B, C_in, L = x_ncl.shape
    K = kernel_size
    p = K // 2
    Cp, Hp, Op = packed['Cp'], packed['Hp'], packed['Op']
    n_hidden = packed['n_hidden']

    # per-batch row strides rounded to the bf16 tile (16 rows) so every
    # per-batch base address is tile aligned.
    lp_stride = _round_up(L + 2 * p, 16)     # padded-input / hpad row stride
    lo_stride = _round_up(L, 16)             # conv-output / im2col row stride

    # channels-last, zero-pad channels to a lane multiple, zero-pad length per
    # batch to the aligned stride, flatten to 2D, cast to bf16 once.
    x = jnp.transpose(x_ncl, (0, 2, 1))                          # (B, L, C)
    x = jnp.pad(x, ((0, 0), (p, lp_stride - L - p), (0, Cp - C_in)))
    x = x.reshape(B * lp_stride, Cp).astype(jnp.bfloat16)

    kernel = _make_fused_kernel(B, L, K, n_hidden, Cp, Hp, Op,
                                lp_stride, lo_stride)

    in_arrays = [x]
    in_specs = [_full_spec(x.shape)]
    for (w, g, b) in packed['hidden']:
        in_arrays += [w, g, b]
        in_specs += [_full_spec(w.shape), _full_spec(g.shape), _full_spec(b.shape)]
    in_arrays += [packed['final_w'], packed['final_b']]
    in_specs += [_full_spec(packed['final_w'].shape),
                 _full_spec(packed['final_b'].shape)]

    col_w = K * max(Cp, Hp)

    out = pl.pallas_call(
        kernel,
        out_shape=jax.ShapeDtypeStruct((B * L, Op), jnp.float32),
        in_specs=in_specs,
        out_specs=_full_spec((B * L, Op)),
        scratch_shapes=[
            pltpu.VMEM((B * lo_stride, Hp), jnp.float32),     # conv accumulator
            pltpu.VMEM((B * lo_stride, col_w), jnp.bfloat16),  # in-VMEM im2col
            pltpu.VMEM((B * lp_stride, Hp), jnp.bfloat16),     # padded hidden act
        ],
    )(*in_arrays)

    # split packed lane-dense output back into per-head (B, C_out, L).
    # NOTE: Op=128 lanes carry few real channels; keeping the packed output is
    # vst-efficient, the real channels are sliced out here in XLA.
    ret = {}
    offs = packed['out_offsets']
    for j, name in enumerate(packed['names']):
        oc = offs[j + 1] - offs[j]
        y = out[:, offs[j]:offs[j] + oc].reshape(B, L, oc)
        ret[name] = jnp.transpose(y, (0, 2, 1))
    return ret


# -------------------------- pure-JAX reference check ------------------------

def _im2col_1d(x_blc, K):
    B, L, C = x_blc.shape
    p = K // 2
    x_pad = jnp.pad(x_blc, ((0, 0), (p, p), (0, 0)))
    cols = jnp.stack([x_pad[:, k:k + L, :] for k in range(K)], axis=-1)   # (B,L,C,K)
    return cols.reshape(B * L, C * K)


def _torch_w_to_matmul(w_oik):
    C_out, C_in, K = w_oik.shape
    return jnp.transpose(w_oik, (1, 2, 0)).reshape(C_in * K, C_out)


def reference_forward(x_ncl, params, sep_head_dict, kernel_size):
    B, _, L = x_ncl.shape
    hi = jax.lax.Precision.HIGHEST
    ret = {}
    for name in sep_head_dict:
        h = jnp.transpose(x_ncl, (0, 2, 1))
        for (w, gamma, beta) in params[name]['hidden']:
            y = jnp.dot(_im2col_1d(h, kernel_size), _torch_w_to_matmul(w), precision=hi)
            mean = jnp.mean(y, axis=0, keepdims=True)
            var = jnp.mean((y - mean) ** 2, axis=0, keepdims=True)   # biased (train-mode BN)
            y = jnp.maximum((y - mean) * jax.lax.rsqrt(var + BN_EPS) * gamma[None, :]
                            + beta[None, :], 0.0)
            h = y.reshape(B, L, -1)
        w, b = params[name]['final']
        y = jnp.dot(_im2col_1d(h, kernel_size), _torch_w_to_matmul(w),
                    precision=hi) + b[None, :]
        ret[name] = jnp.transpose(y.reshape(B, L, -1), (0, 2, 1))
    return ret


# ----------------------------------- main -----------------------------------

if __name__ == "__main__":
    B, C_IN, L = 2, 32, 8            # (batch, input_channels, num_proposals)
    HEAD_CH, K = 32, 3
    SEP_HEAD_DICT = {
        'center': {'out_channels': 2, 'num_conv': 2},
        'height': {'out_channels': 1, 'num_conv': 2},
        'hm':     {'out_channels': 3, 'num_conv': 2},   # exercises init_bias branch
    }

    key = jax.random.PRNGKey(0)
    params, key = init_params(key, C_IN, HEAD_CH, K, SEP_HEAD_DICT)
    packed = pack_params(params, SEP_HEAD_DICT, C_IN, HEAD_CH, K)
    key, sub = jax.random.split(key)
    x = jax.random.normal(sub, (B, C_IN, L), jnp.float32)

    out = separate_head_forward(x, packed, K)
    out = jax.tree_util.tree_map(jax.block_until_ready, out)

    ref = reference_forward(x, params, SEP_HEAD_DICT, K)
    for name, cfg in SEP_HEAD_DICT.items():
        assert out[name].shape == (B, cfg['out_channels'], L), out[name].shape
        np.testing.assert_allclose(np.asarray(out[name]), np.asarray(ref[name]),
                                   rtol=5e-2, atol=5e-2)

    print("KERNEL_OK")
</pallas_src>

<mosaic_0001>
module attributes {stable_mosaic.version = 11 : i64} {
  func.func @kernel(%arg0: memref<32x128xbf16, #tpu.memory_space<vmem>>, %arg1: memref<384x128xbf16, #tpu.memory_space<vmem>>, %arg2: memref<1x128xf32, #tpu.memory_space<vmem>>, %arg3: memref<1x128xf32, #tpu.memory_space<vmem>>, %arg4: memref<384x128xbf16, #tpu.memory_space<vmem>>, %arg5: memref<1x128xf32, #tpu.memory_space<vmem>>, %arg6: memref<16x128xf32, #tpu.memory_space<vmem>>, %arg7: memref<32x128xf32, #tpu.memory_space<vmem>>, %arg8: memref<32x384xbf16, #tpu.memory_space<vmem>>, %arg9: memref<32x128xbf16, #tpu.memory_space<vmem>>) attributes {dimension_semantics = [], scalar_prefetch = 0 : i64, scratch_operands = 3 : i64, tpu.core_type = #tpu.core_type<tc>} {
    %cst = arith.constant 0.000000e+00 : bf16
    %0 = vector.broadcast %cst : bf16 to vector<8x384xbf16>
    %c8 = arith.constant 8 : index
    %c0 = arith.constant 0 : index
    %1 = vector.load %arg8[%c8, %c0] : memref<32x384xbf16, #tpu.memory_space<vmem>>, vector<8x384xbf16>
    tpu.vector_store %arg8[%c8, %c0], %0 {strides = array<i32>} : memref<32x384xbf16, #tpu.memory_space<vmem>>, vector<8x384xbf16>,
    %cst_0 = arith.constant 0.000000e+00 : bf16
    %2 = vector.broadcast %cst_0 : bf16 to vector<8x384xbf16>
    %c24 = arith.constant 24 : index
    %c0_1 = arith.constant 0 : index
    %3 = vector.load %arg8[%c24, %c0_1] : memref<32x384xbf16, #tpu.memory_space<vmem>>, vector<8x384xbf16>
    tpu.vector_store %arg8[%c24, %c0_1], %2 {strides = array<i32>} : memref<32x384xbf16, #tpu.memory_space<vmem>>, vector<8x384xbf16>,
    %cst_2 = arith.constant 0.000000e+00 : bf16
    %4 = vector.broadcast %cst_2 : bf16 to vector<1x128xbf16>
    %c0_3 = arith.constant 0 : index
    %c0_4 = arith.constant 0 : index
    %5 = vector.load %arg9[%c0_3, %c0_4] : memref<32x128xbf16, #tpu.memory_space<vmem>>, vector<1x128xbf16>
    tpu.vector_store %arg9[%c0_3, %c0_4], %4 {strides = array<i32>} : memref<32x128xbf16, #tpu.memory_space<vmem>>, vector<1x128xbf16>,
    %cst_5 = arith.constant 0.000000e+00 : bf16
    %6 = vector.broadcast %cst_5 : bf16 to vector<7x128xbf16>
    %c9 = arith.constant 9 : index
    %c0_6 = arith.constant 0 : index
    %7 = vector.load %arg9[%c9, %c0_6] : memref<32x128xbf16, #tpu.memory_space<vmem>>, vector<7x128xbf16>
    tpu.vector_store %arg9[%c9, %c0_6], %6 {strides = array<i32>} : memref<32x128xbf16, #tpu.memory_space<vmem>>, vector<7x128xbf16>,
    %cst_7 = arith.constant 0.000000e+00 : bf16
    %8 = vector.broadcast %cst_7 : bf16 to vector<1x128xbf16>
    %c16 = arith.constant 16 : index
    %c0_8 = arith.constant 0 : index
    %9 = vector.load %arg9[%c16, %c0_8] : memref<32x128xbf16, #tpu.memory_space<vmem>>, vector<1x128xbf16>
    tpu.vector_store %arg9[%c16, %c0_8], %8 {strides = array<i32>} : memref<32x128xbf16, #tpu.memory_space<vmem>>, vector<1x128xbf16>,
    %cst_9 = arith.constant 0.000000e+00 : bf16
    %10 = vector.broadcast %cst_9 : bf16 to vector<7x128xbf16>
    %c25 = arith.constant 25 : index
    %c0_10 = arith.constant 0 : index
    %11 = vector.load %arg9[%c25, %c0_10] : memref<32x128xbf16, #tpu.memory_space<vmem>>, vector<7x128xbf16>
    tpu.vector_store %arg9[%c25, %c0_10], %10 {strides = array<i32>} : memref<32x128xbf16, #tpu.memory_space<vmem>>, vector<7x128xbf16>,
    %c0_11 = arith.constant 0 : index
    %c0_12 = arith.constant 0 : index
    %12 = vector.load %arg0[%c0_11, %c0_12] : memref<32x128xbf16, #tpu.memory_space<vmem>>, vector<8x128xbf16>
    %c0_13 = arith.constant 0 : index
    %c0_14 = arith.constant 0 : index
    %13 = vector.load %arg8[%c0_13, %c0_14] : memref<32x384xbf16, #tpu.memory_space<vmem>>, vector<8x128xbf16>
    tpu.vector_store %arg8[%c0_13, %c0_14], %12 {strides = array<i32>} : memref<32x384xbf16, #tpu.memory_space<vmem>>, vector<8x128xbf16>,
    %c1 = arith.constant 1 : index
    %c0_15 = arith.constant 0 : index
    %14 = vector.load %arg0[%c1, %c0_15] : memref<32x128xbf16, #tpu.memory_space<vmem>>, vector<8x128xbf16>
    %c0_16 = arith.constant 0 : index
    %c128 = arith.constant 128 : index
    %15 = vector.load %arg8[%c0_16, %c128] : memref<32x384xbf16, #tpu.memory_space<vmem>>, vector<8x128xbf16>
    tpu.vector_store %arg8[%c0_16, %c128], %14 {strides = array<i32>} : memref<32x384xbf16, #tpu.memory_space<vmem>>, vector<8x128xbf16>,
    %c2 = arith.constant 2 : index
    %c0_17 = arith.constant 0 : index
    %16 = vector.load %arg0[%c2, %c0_17] : memref<32x128xbf16, #tpu.memory_space<vmem>>, vector<8x128xbf16>
    %c0_18 = arith.constant 0 : index
    %c256 = arith.constant 256 : index
    %17 = vector.load %arg8[%c0_18, %c256] : memref<32x384xbf16, #tpu.memory_space<vmem>>, vector<8x128xbf16>
    tpu.vector_store %arg8[%c0_18, %c256], %16 {strides = array<i32>} : memref<32x384xbf16, #tpu.memory_space<vmem>>, vector<8x128xbf16>,
    %c16_19 = arith.constant 16 : index
    %c0_20 = arith.constant 0 : index
    %18 = vector.load %arg0[%c16_19, %c0_20] : memref<32x128xbf16, #tpu.memory_space<vmem>>, vector<8x128xbf16>
    %c16_21 = arith.constant 16 : index
    %c0_22 = arith.constant 0 : index
    %19 = vector.load %arg8[%c16_21, %c0_22] : memref<32x384xbf16, #tpu.memory_space<vmem>>, vector<8x128xbf16>
    tpu.vector_store %arg8[%c16_21, %c0_22], %18 {strides = array<i32>} : memref<32x384xbf16, #tpu.memory_space<vmem>>, vector<8x128xbf16>,
    %c17 = arith.constant 17 : index
    %c0_23 = arith.constant 0 : index
    %20 = vector.load %arg0[%c17, %c0_23] : memref<32x128xbf16, #tpu.memory_space<vmem>>, vector<8x128xbf16>
    %c16_24 = arith.constant 16 : index
    %c128_25 = arith.constant 128 : index
    %21 = vector.load %arg8[%c16_24, %c128_25] : memref<32x384xbf16, #tpu.memory_space<vmem>>, vector<8x128xbf16>
    tpu.vector_store %arg8[%c16_24, %c128_25], %20 {strides = array<i32>} : memref<32x384xbf16, #tpu.memory_space<vmem>>, vector<8x128xbf16>,
    %c18 = arith.constant 18 : index
    %c0_26 = arith.constant 0 : index
    %22 = vector.load %arg0[%c18, %c0_26] : memref<32x128xbf16, #tpu.memory_space<vmem>>, vector<8x128xbf16>
    %c16_27 = arith.constant 16 : index
    %c256_28 = arith.constant 256 : index
    %23 = vector.load %arg8[%c16_27, %c256_28] : memref<32x384xbf16, #tpu.memory_space<vmem>>, vector<8x128xbf16>
    tpu.vector_store %arg8[%c16_27, %c256_28], %22 {strides = array<i32>} : memref<32x384xbf16, #tpu.memory_space<vmem>>, vector<8x128xbf16>,
    %c0_29 = arith.constant 0 : index
    %c0_30 = arith.constant 0 : index
    %24 = vector.load %arg8[%c0_29, %c0_30] : memref<32x384xbf16, #tpu.memory_space<vmem>>, vector<32x384xbf16>
    %c0_31 = arith.constant 0 : index
    %c0_32 = arith.constant 0 : index
    %25 = vector.load %arg1[%c0_31, %c0_32] : memref<384x128xbf16, #tpu.memory_space<vmem>>, vector<384x128xbf16>
    %cst_33 = arith.constant dense<0.000000e+00> : vector<32x128xf32>
    %26 = tpu.matmul %24, %25, %cst_33 {dimension_numbers = #tpu.dot_dimension_numbers<[1], [0], [0], [1], [0, 0, 1, 1], [], []>} : vector<32x384xbf16>, vector<384x128xbf16>, vector<32x128xf32> -> vector<32x128xf32>
    %c0_34 = arith.constant 0 : index
    %c0_35 = arith.constant 0 : index
    %27 = vector.load %arg7[%c0_34, %c0_35] : memref<32x128xf32, #tpu.memory_space<vmem>>, vector<32x128xf32>
    tpu.vector_store %arg7[%c0_34, %c0_35], %26 {strides = array<i32>} : memref<32x128xf32, #tpu.memory_space<vmem>>, vector<32x128xf32>,
    %c0_36 = arith.constant 0 : index
    %c0_37 = arith.constant 0 : index
    %28 = vector.load %arg7[%c0_36, %c0_37] : memref<32x128xf32, #tpu.memory_space<vmem>>, vector<32x128xf32>
    %cst_38 = arith.constant dense<0.000000e+00> : vector<128xf32>
    %29 = vector.multi_reduction <add>, %28, %cst_38 [0] : vector<32x128xf32> to vector<128xf32>
    %30 = vector.shape_cast %29 : vector<128xf32> to vector<1x128xf32>
    %cst_39 = arith.constant 6.250000e-02 : f32
    %31 = vector.broadcast %cst_39 : f32 to vector<1x128xf32>
    %32 = arith.mulf %30, %31 : vector<1x128xf32>
    %33 = arith.mulf %28, %28 : vector<32x128xf32>
    %cst_40 = arith.constant dense<0.000000e+00> : vector<128xf32>
    %34 = vector.multi_reduction <add>, %33, %cst_40 [0] : vector<32x128xf32> to vector<128xf32>
    %35 = vector.shape_cast %34 : vector<128xf32> to vector<1x128xf32>
    %cst_41 = arith.constant 6.250000e-02 : f32
    %36 = vector.broadcast %cst_41 : f32 to vector<1x128xf32>
    %37 = arith.mulf %35, %36 : vector<1x128xf32>
    %38 = arith.mulf %32, %32 : vector<1x128xf32>
    %39 = arith.subf %37, %38 : vector<1x128xf32>
    %cst_42 = arith.constant 0.000000e+00 : f32
    %40 = vector.broadcast %cst_42 : f32 to vector<1x128xf32>
    %41 = arith.maximumf %39, %40 : vector<1x128xf32>
    %c0_43 = arith.constant 0 : index
    %c0_44 = arith.constant 0 : index
    %42 = vector.load %arg2[%c0_43, %c0_44] : memref<1x128xf32, #tpu.memory_space<vmem>>, vector<1x128xf32>
    %cst_45 = arith.constant 9.99999974E-6 : f32
    %43 = vector.broadcast %cst_45 : f32 to vector<1x128xf32>
    %44 = arith.addf %41, %43 : vector<1x128xf32>
    %45 = math.rsqrt %44 : vector<1x128xf32>
    %46 = arith.mulf %42, %45 : vector<1x128xf32>
    %c0_46 = arith.constant 0 : index
    %c0_47 = arith.constant 0 : index
    %47 = vector.load %arg3[%c0_46, %c0_47] : memref<1x128xf32, #tpu.memory_space<vmem>>, vector<1x128xf32>
    %48 = arith.mulf %32, %46 : vector<1x128xf32>
    %49 = arith.subf %47, %48 : vector<1x128xf32>
    %50 = vector.broadcast %46 : vector<1x128xf32> to vector<32x128xf32>
    %51 = arith.mulf %28, %50 : vector<32x128xf32>
    %52 = vector.broadcast %49 : vector<1x128xf32> to vector<32x128xf32>
    %53 = arith.addf %51, %52 : vector<32x128xf32>
    %cst_48 = arith.constant 0.000000e+00 : f32
    %54 = vector.broadcast %cst_48 : f32 to vector<32x128xf32>
    %55 = arith.maximumf %53, %54 : vector<32x128xf32>
    %56 = vector.extract_strided_slice %55 {offsets = [0, 0], sizes = [8, 128], strides = [1, 1]} : vector<32x128xf32> to vector<8x128xf32>
    %57 = arith.truncf %56 : vector<8x128xf32> to vector<8x128xbf16>
    %c1_49 = arith.constant 1 : index
    %c0_50 = arith.constant 0 : index
    %58 = vector.load %arg9[%c1_49, %c0_50] : memref<32x128xbf16, #tpu.memory_space<vmem>>, vector<8x128xbf16>
    tpu.vector_store %arg9[%c1_49, %c0_50], %57 {strides = array<i32>} : memref<32x128xbf16, #tpu.memory_space<vmem>>, vector<8x128xbf16>,
    %59 = vector.extract_strided_slice %55 {offsets = [16, 0], sizes = [8, 128], strides = [1, 1]} : vector<32x128xf32> to vector<8x128xf32>
    %60 = arith.truncf %59 : vector<8x128xf32> to vector<8x128xbf16>
    %c17_51 = arith.constant 17 : index
    %c0_52 = arith.constant 0 : index
    %61 = vector.load %arg9[%c17_51, %c0_52] : memref<32x128xbf16, #tpu.memory_space<vmem>>, vector<8x128xbf16>
    tpu.vector_store %arg9[%c17_51, %c0_52], %60 {strides = array<i32>} : memref<32x128xbf16, #tpu.memory_space<vmem>>, vector<8x128xbf16>,
    %c0_53 = arith.constant 0 : index
    %c0_54 = arith.constant 0 : index
    %62 = vector.load %arg9[%c0_53, %c0_54] : memref<32x128xbf16, #tpu.memory_space<vmem>>, vector<8x128xbf16>
    %c0_55 = arith.constant 0 : index
    %c0_56 = arith.constant 0 : index
    %63 = vector.load %arg8[%c0_55, %c0_56] : memref<32x384xbf16, #tpu.memory_space<vmem>>, vector<8x128xbf16>
    tpu.vector_store %arg8[%c0_55, %c0_56], %62 {strides = array<i32>} : memref<32x384xbf16, #tpu.memory_space<vmem>>, vector<8x128xbf16>,
    %c1_57 = arith.constant 1 : index
    %c0_58 = arith.constant 0 : index
    %64 = vector.load %arg9[%c1_57, %c0_58] : memref<32x128xbf16, #tpu.memory_space<vmem>>, vector<8x128xbf16>
    %c0_59 = arith.constant 0 : index
    %c128_60 = arith.constant 128 : index
    %65 = vector.load %arg8[%c0_59, %c128_60] : memref<32x384xbf16, #tpu.memory_space<vmem>>, vector<8x128xbf16>
    tpu.vector_store %arg8[%c0_59, %c128_60], %64 {strides = array<i32>} : memref<32x384xbf16, #tpu.memory_space<vmem>>, vector<8x128xbf16>,
    %c2_61 = arith.constant 2 : index
    %c0_62 = arith.constant 0 : index
    %66 = vector.load %arg9[%c2_61, %c0_62] : memref<32x128xbf16, #tpu.memory_space<vmem>>, vector<8x128xbf16>
    %c0_63 = arith.constant 0 : index
    %c256_64 = arith.constant 256 : index
    %67 = vector.load %arg8[%c0_63, %c256_64] : memref<32x384xbf16, #tpu.memory_space<vmem>>, vector<8x128xbf16>
    tpu.vector_store %arg8[%c0_63, %c256_64], %66 {strides = array<i32>} : memref<32x384xbf16, #tpu.memory_space<vmem>>, vector<8x128xbf16>,
    %c16_65 = arith.constant 16 : index
    %c0_66 = arith.constant 0 : index
    %68 = vector.load %arg9[%c16_65, %c0_66] : memref<32x128xbf16, #tpu.memory_space<vmem>>, vector<8x128xbf16>
    %c16_67 = arith.constant 16 : index
    %c0_68 = arith.constant 0 : index
    %69 = vector.load %arg8[%c16_67, %c0_68] : memref<32x384xbf16, #tpu.memory_space<vmem>>, vector<8x128xbf16>
    tpu.vector_store %arg8[%c16_67, %c0_68], %68 {strides = array<i32>} : memref<32x384xbf16, #tpu.memory_space<vmem>>, vector<8x128xbf16>,
    %c17_69 = arith.constant 17 : index
    %c0_70 = arith.constant 0 : index
    %70 = vector.load %arg9[%c17_69, %c0_70] : memref<32x128xbf16, #tpu.memory_space<vmem>>, vector<8x128xbf16>
    %c16_71 = arith.constant 16 : index
    %c128_72 = arith.constant 128 : index
    %71 = vector.load %arg8[%c16_71, %c128_72] : memref<32x384xbf16, #tpu.memory_space<vmem>>, vector<8x128xbf16>
    tpu.vector_store %arg8[%c16_71, %c128_72], %70 {strides = array<i32>} : memref<32x384xbf16, #tpu.memory_space<vmem>>, vector<8x128xbf16>,
    %c18_73 = arith.constant 18 : index
    %c0_74 = arith.constant 0 : index
    %72 = vector.load %arg9[%c18_73, %c0_74] : memref<32x128xbf16, #tpu.memory_space<vmem>>, vector<8x128xbf16>
    %c16_75 = arith.constant 16 : index
    %c256_76 = arith.constant 256 : index
    %73 = vector.load %arg8[%c16_75, %c256_76] : memref<32x384xbf16, #tpu.memory_space<vmem>>, vector<8x128xbf16>
    tpu.vector_store %arg8[%c16_75, %c256_76], %72 {strides = array<i32>} : memref<32x384xbf16, #tpu.memory_space<vmem>>, vector<8x128xbf16>,
    %c0_77 = arith.constant 0 : index
    %c0_78 = arith.constant 0 : index
    %74 = vector.load %arg8[%c0_77, %c0_78] : memref<32x384xbf16, #tpu.memory_space<vmem>>, vector<32x384xbf16>
    %c0_79 = arith.constant 0 : index
    %c0_80 = arith.constant 0 : index
    %75 = vector.load %arg4[%c0_79, %c0_80] : memref<384x128xbf16, #tpu.memory_space<vmem>>, vector<384x128xbf16>
    %cst_81 = arith.constant dense<0.000000e+00> : vector<32x128xf32>
    %76 = tpu.matmul %74, %75, %cst_81 {dimension_numbers = #tpu.dot_dimension_numbers<[1], [0], [0], [1], [0, 0, 1, 1], [], []>} : vector<32x384xbf16>, vector<384x128xbf16>, vector<32x128xf32> -> vector<32x128xf32>
    %c0_82 = arith.constant 0 : index
    %c0_83 = arith.constant 0 : index
    %77 = vector.load %arg5[%c0_82, %c0_83] : memref<1x128xf32, #tpu.memory_space<vmem>>, vector<1x128xf32>
    %78 = vector.broadcast %77 : vector<1x128xf32> to vector<32x128xf32>
    %79 = arith.addf %76, %78 : vector<32x128xf32>
    %80 = vector.extract_strided_slice %79 {offsets = [0, 0], sizes = [8, 128], strides = [1, 1]} : vector<32x128xf32> to vector<8x128xf32>
    %c0_84 = arith.constant 0 : index
    %c0_85 = arith.constant 0 : index
    %81 = vector.load %arg6[%c0_84, %c0_85] : memref<16x128xf32, #tpu.memory_space<vmem>>, vector<8x128xf32>
    tpu.vector_store %arg6[%c0_84, %c0_85], %80 {strides = array<i32>} : memref<16x128xf32, #tpu.memory_space<vmem>>, vector<8x128xf32>,
    %82 = vector.extract_strided_slice %79 {offsets = [16, 0], sizes = [8, 128], strides = [1, 1]} : vector<32x128xf32> to vector<8x128xf32>
    %c8_86 = arith.constant 8 : index
    %c0_87 = arith.constant 0 : index
    %83 = vector.load %arg6[%c8_86, %c0_87] : memref<16x128xf32, #tpu.memory_space<vmem>>, vector<8x128xf32>
    tpu.vector_store %arg6[%c8_86, %c0_87], %82 {strides = array<i32>} : memref<16x128xf32, #tpu.memory_space<vmem>>, vector<8x128xf32>,
    return
  }
}

</mosaic_0001>

<llo_original>
// kernel: tpu_custom_call.1
$region0: #{tpu_custom_call.1}
  #allocation0 [shape = 'u32[]', space=smem, size = 0x4, offset = 0x4, fixed_abs, tag = 'smem constant byte address 0x4 - core index']
  #allocation1 [shape = 'u32[144,128]{1,0:T(1,128)}', space=vmem, size = 0x12000, scoped, tag = 'internal scratch']
  #allocation2 [shape = 'f32[32,128]{1,0:T(8,128)}', space=vmem, size = 0x4000, scoped, tag = 'scratch operand']
  #allocation3 [shape = 'bf16[32,384]{1,0:T(16,128)(2,1)}', space=vmem, size = 0x6000, scoped, tag = 'scratch operand']
  #allocation4 [shape = 'bf16[32,128]{1,0:T(16,128)(2,1)}', space=vmem, size = 0x2000, scoped, tag = 'scratch operand']
  %s0 = inlined_call_operand.hbm [shape: bf16[32,128], index: 0, kind: input, shape index: {}]
  %s1 = inlined_call_operand.hbm [shape: bf16[384,128], index: 1, kind: input, shape index: {}]
  %s2 = inlined_call_operand.vmem [shape: f32[1,128], index: 2, kind: input, shape index: {}]
  %s3 = inlined_call_operand.vmem [shape: f32[1,128], index: 3, kind: input, shape index: {}]
  %s4 = inlined_call_operand.hbm [shape: bf16[384,128], index: 4, kind: input, shape index: {}]
  %s5 = inlined_call_operand.vmem [shape: f32[1,128], index: 5, kind: input, shape index: {}]
  %s6 = inlined_call_operand.hbm [shape: f32[16,128], index: 6, kind: output, shape index: {}]
  %s7 = sld [smem:[#allocation0]]
  $region46: #{tpu_custom_call.1} parent=0
    _
  %s9 = ssub.s32 1, %s7
  %s10 = scalar_select 0, %s9, %s7
  $region1: #{tpu_custom_call.1} parent=0
    #allocation5 [shape = 'u8[8192]{0}', space=vmem, size = 0x2000, scoped, tag = 'input window, operand 0, single buffered']
    #allocation6 [shape = 's32[1]{0}', space=sflag, size = 0x4, scoped, tag = 'scoped memory for tpu_custom_call.1']
    #allocation7 [shape = 's32[1]{0}', space=sflag, size = 0x4, scoped, tag = 'scoped memory for tpu_custom_call.1']
    #allocation8 [shape = 'u8[98304]{0}', space=vmem, size = 0x18000, scoped, tag = 'input window, operand 1, single buffered']
    #allocation9 [shape = 's32[1]{0}', space=sflag, size = 0x4, scoped, tag = 'scoped memory for tpu_custom_call.1']
    #allocation10 [shape = 'u8[98304]{0}', space=vmem, size = 0x18000, scoped, tag = 'input window, operand 4, single buffered']
    #allocation11 [shape = 'u8[8192]{0}', space=vmem, size = 0x2000, scoped, tag = 'output window, operand 0, single buffered']
    %11 = vsyncpa [#allocation6], 0
    %12 = vsyncpa [#allocation9], 0
    %13 = vsyncpa [#allocation7], 0
    // Predicated region
    $region2: #{tpu_custom_call.1} parent=1 // pred_check
      _
    $region3: #{tpu_custom_call.1} parent=1 // pred_check_branch
      %15 = sbr.rel (0) target = $region5
    $region4: #{tpu_custom_call.1} parent=1 // pred_region
      %s17 = ssub.s32 256, 256
      %18 = vsyncadd [#allocation6], %s17
      %s19 = sshll.u32 [#allocation5], 4
      %s20 = int_to_ptr.vmem [resolvable:$true] %s19
      %25 = dma.hbm_to_vmem [thread:$0]  %s0, 256, %s20, [#allocation6], 64, 64, 4
    $region5: #{tpu_custom_call.1} parent=1 // pred_fallthru
      _
    // Predicated region
    $region6: #{tpu_custom_call.1} parent=1 // pred_check
      _
    $region7: #{tpu_custom_call.1} parent=1 // pred_check_branch
      %27 = sbr.rel (0) target = $region9
    $region8: #{tpu_custom_call.1} parent=1 // pred_region
      %s29 = ssub.s32 3072, 3072
      %30 = vsyncadd [#allocation9], %s29
      %s31 = sshll.u32 [#allocation8], 4
      %s32 = int_to_ptr.vmem [resolvable:$true] %s31
      %37 = dma.hbm_to_vmem [thread:$0]  %s1, 3072, %s32, [#allocation9], 64, 64, 4
    $region9: #{tpu_custom_call.1} parent=1 // pred_fallthru
      _
    // Predicated region
    $region10: #{tpu_custom_call.1} parent=1 // pred_check
      _
    $region11: #{tpu_custom_call.1} parent=1 // pred_check_branch
      %39 = sbr.rel (0) target = $region13
    $region12: #{tpu_custom_call.1} parent=1 // pred_region
      _
    $region13: #{tpu_custom_call.1} parent=1 // pred_fallthru
      _
    // Predicated region
    $region14: #{tpu_custom_call.1} parent=1 // pred_check
      _
    $region15: #{tpu_custom_call.1} parent=1 // pred_check_branch
      %41 = sbr.rel (0) target = $region17
    $region16: #{tpu_custom_call.1} parent=1 // pred_region
      _
    $region17: #{tpu_custom_call.1} parent=1 // pred_fallthru
      _
    // Predicated region
    $region18: #{tpu_custom_call.1} parent=1 // pred_check
      _
    $region19: #{tpu_custom_call.1} parent=1 // pred_check_branch
      %43 = sbr.rel (0) target = $region21
    $region20: #{tpu_custom_call.1} parent=1 // pred_region
      %s45 = ssub.s32 3072, 3072
      %46 = vsyncadd [#allocation9], %s45
      %s47 = sshll.u32 [#allocation10], 4
      %s48 = int_to_ptr.vmem [resolvable:$true] %s47
      %53 = dma.hbm_to_vmem [thread:$0]  %s4, 3072, %s48, [#allocation9], 64, 64, 4
    $region21: #{tpu_custom_call.1} parent=1 // pred_fallthru
      _
    // Predicated region
    $region22: #{tpu_custom_call.1} parent=1 // pred_check
      _
    $region23: #{tpu_custom_call.1} parent=1 // pred_check_branch
      %55 = sbr.rel (0) target = $region25
    $region24: #{tpu_custom_call.1} parent=1 // pred_region
      _
    $region25: #{tpu_custom_call.1} parent=1 // pred_fallthru
      _
    // Predicated region
    $region26: #{tpu_custom_call.1} parent=1 // pred_check
      _
    $region27: #{tpu_custom_call.1} parent=1 // pred_check_branch
      %57 = sbr.rel (0) target = $region29
    $region28: #{tpu_custom_call.1} parent=1 // pred_region
      %58 = dma.done [#allocation6], 256
    $region29: #{tpu_custom_call.1} parent=1 // pred_fallthru
      _
    // Predicated region
    $region30: #{tpu_custom_call.1} parent=1 // pred_check
      _
    $region31: #{tpu_custom_call.1} parent=1 // pred_check_branch
      %60 = sbr.rel (0) target = $region33
    $region32: #{tpu_custom_call.1} parent=1 // pred_region
      %61 = dma.done [#allocation9], 3072
    $region33: #{tpu_custom_call.1} parent=1 // pred_fallthru
      _
    // Predicated region
    $region34: #{tpu_custom_call.1} parent=1 // pred_check
      _
    $region35: #{tpu_custom_call.1} parent=1 // pred_check_branch
      %63 = sbr.rel (0) target = $region37
    $region36: #{tpu_custom_call.1} parent=1 // pred_region
      %64 = dma.done [#allocation9], 3072
    $region37: #{tpu_custom_call.1} parent=1 // pred_fallthru
      _
    %66 = vst [vmem:[#allocation3] sm:$0xf0] 0
    %67 = vst [vmem:[#allocation3 + $0x8] sm:$0xf0] 0
    %68 = vst [vmem:[#allocation3 + $0x10] sm:$0xf0] 0
    %69 = vst [vmem:[#allocation3 + $0x18] sm:$0xf0] 0
    %70 = vst [vmem:[#allocation3 + $0x20] sm:$0xf0] 0
    %71 = vst [vmem:[#allocation3 + $0x28] sm:$0xf0] 0
    %vm72 = vcmask 1040384
    %vm73 = vsmask.f32 256
    %vm74 = vmand %vm72, %vm73
    %v75 = vld [vmem:[#allocation4] sm:$0x1]
    %v76 = vsel %vm74, 0, %v75
    %77 = vst [vmem:[#allocation4] sm:$0x1] %v76
    %vm78 = vcmask 1047556
    %vm79 = vsmask.f32 7954
    %vm80 = vmand %vm78, %vm79
    %v81 = vld [vmem:[#allocation4] sm:$0xf0]
    %v82 = vsel %vm80, 0, %v81
    %83 = vst [vmem:[#allocation4] sm:$0xf0] %v82
    %v84 = vld [vmem:[#allocation4 + $0x8] sm:$0x1]
    %v85 = vsel %vm74, 0, %v84
    %86 = vst [vmem:[#allocation4 + $0x8] sm:$0x1] %v85
    %v87 = vld [vmem:[#allocation4 + $0x8] sm:$0xf0]
    %v88 = vsel %vm80, 0, %v87
    %89 = vst [vmem:[#allocation4 + $0x8] sm:$0xf0] %v88
    %v90 = vld [vmem:[#allocation5] sm:$0xf]
    %91 = vst [vmem:[#allocation3] sm:$0xf] %v90
    %v92 = vld [vmem:[#allocation5] sm:$0xf]
    %v93 = vld [vmem:[#allocation5 + $0x4] sm:$0x1]
    %v96 = vunpack.c.l.b16 %v92
    %v97 = vunpack.c.l.b16 %v93
    %v98 = vpack.c.b16 %v97, %v96
    %v100 = vshrl.u32 %v98, 16
    %v102 = vshll.u32 %v98, 16
    %v104 = vrot.slane %v102, 1
    %v105 = vor.u32 %v100, %v104
    %107 = vst [vmem:[#allocation3 + $0x8] sm:$0xf] %v105
    %v108 = vld [vmem:[#allocation5] sm:$0xe]
    %v109 = vld [vmem:[#allocation5 + $0x4] sm:$0x1]
    %v112 = vunpack.c.l.b16 %v108
    %v113 = vunpack.c.l.b16 %v109
    %v114 = vpack.c.b16 %v113, %v112
    %v115 = vrot.slane %v114, 1
    %117 = vst [vmem:[#allocation3 + $0x10] sm:$0xf] %v115
    %v118 = vld [vmem:[#allocation5 + $0x8] sm:$0xf]
    %119 = vst [vmem:[#allocation3 + $0x18] sm:$0xf] %v118
    %v120 = vld [vmem:[#allocation5 + $0x8] sm:$0xf]
    %v121 = vld [vmem:[#allocation5 + $0xc] sm:$0x1]
    %v124 = vunpack.c.l.b16 %v120
    %v125 = vunpack.c.l.b16 %v121
    %v126 = vpack.c.b16 %v125, %v124
    %v128 = vshrl.u32 %v126, 16
    %v130 = vshll.u32 %v126, 16
    %v132 = vrot.slane %v130, 1
    %v133 = vor.u32 %v128, %v132
    %135 = vst [vmem:[#allocation3 + $0x20] sm:$0xf] %v133
    %v136 = vld [vmem:[#allocation5 + $0x8] sm:$0xe]
    %v137 = vld [vmem:[#allocation5 + $0xc] sm:$0x1]
    %v140 = vunpack.c.l.b16 %v136
    %v141 = vunpack.c.l.b16 %v137
    %v142 = vpack.c.b16 %v141, %v140
    %v143 = vrot.slane %v142, 1
    %145 = vst [vmem:[#allocation3 + $0x28] sm:$0xf] %v143
    %v146 = vld [vmem:[#allocation3] sm:$0xff]
    %v147 = vld [vmem:[#allocation3 + $0x8] sm:$0xff]
    %v148 = vld [vmem:[#allocation3 + $0x10] sm:$0xff]
    %v149 = vld [vmem:[#allocation3 + $0x18] sm:$0xff]
    %v150 = vld [vmem:[#allocation3 + $0x20] sm:$0xff]
    %v151 = vld [vmem:[#allocation3 + $0x28] sm:$0xff]
    %v152 = vld [vmem:[#allocation8] sm:$0xf]
    %v153 = vld [vmem:[#allocation8 + $0x4] sm:$0xf]
    %v154 = vld [vmem:[#allocation8 + $0x8] sm:$0xf]
    %v155 = vld [vmem:[#allocation8 + $0xc] sm:$0xf]
    %v156 = vld [vmem:[#allocation8 + $0x10] sm:$0xf]
    %v157 = vld [vmem:[#allocation8 + $0x14] sm:$0xf]
    %v158 = vld [vmem:[#allocation8 + $0x18] sm:$0xf]
    %v159 = vld [vmem:[#allocation8 + $0x1c] sm:$0xf]
    %v160 = vld [vmem:[#allocation8 + $0x20] sm:$0xf]
    %v161 = vld [vmem:[#allocation8 + $0x24] sm:$0xf]
    %v162 = vld [vmem:[#allocation8 + $0x28] sm:$0xf]
    %v163 = vld [vmem:[#allocation8 + $0x2c] sm:$0xf]
    %v164 = vld [vmem:[#allocation8 + $0x30] sm:$0xf]
    %v165 = vld [vmem:[#allocation8 + $0x34] sm:$0xf]
    %v166 = vld [vmem:[#allocation8 + $0x38] sm:$0xf]
    %v167 = vld [vmem:[#allocation8 + $0x3c] sm:$0xf]
    %v168 = vld [vmem:[#allocation8 + $0x40] sm:$0xf]
    %v169 = vld [vmem:[#allocation8 + $0x44] sm:$0xf]
    %v170 = vld [vmem:[#allocation8 + $0x48] sm:$0xf]
    %v171 = vld [vmem:[#allocation8 + $0x4c] sm:$0xf]
    %v172 = vld [vmem:[#allocation8 + $0x50] sm:$0xf]
    %v173 = vld [vmem:[#allocation8 + $0x54] sm:$0xf]
    %v174 = vld [vmem:[#allocation8 + $0x58] sm:$0xf]
    %v175 = vld [vmem:[#allocation8 + $0x5c] sm:$0xf]
    %v176 = vld [vmem:[#allocation8 + $0x60] sm:$0xf]
    %v177 = vld [vmem:[#allocation8 + $0x64] sm:$0xf]
    %v178 = vld [vmem:[#allocation8 + $0x68] sm:$0xf]
    %v179 = vld [vmem:[#allocation8 + $0x6c] sm:$0xf]
    %v180 = vld [vmem:[#allocation8 + $0x70] sm:$0xf]
    %v181 = vld [vmem:[#allocation8 + $0x74] sm:$0xf]
    %v182 = vld [vmem:[#allocation8 + $0x78] sm:$0xf]
    %v183 = vld [vmem:[#allocation8 + $0x7c] sm:$0xf]
    %v184 = vld [vmem:[#allocation8 + $0x80] sm:$0xf]
    %v185 = vld [vmem:[#allocation8 + $0x84] sm:$0xf]
    %v186 = vld [vmem:[#allocation8 + $0x88] sm:$0xf]
    %v187 = vld [vmem:[#allocation8 + $0x8c] sm:$0xf]
    %v188 = vld [vmem:[#allocation8 + $0x90] sm:$0xf]
    %v189 = vld [vmem:[#allocation8 + $0x94] sm:$0xf]
    %v190 = vld [vmem:[#allocation8 + $0x98] sm:$0xf]
    %v191 = vld [vmem:[#allocation8 + $0x9c] sm:$0xf]
    %v192 = vld [vmem:[#allocation8 + $0xa0] sm:$0xf]
    %v193 = vld [vmem:[#allocation8 + $0xa4] sm:$0xf]
    %v194 = vld [vmem:[#allocation8 + $0xa8] sm:$0xf]
    %v195 = vld [vmem:[#allocation8 + $0xac] sm:$0xf]
    %v196 = vld [vmem:[#allocation8 + $0xb0] sm:$0xf]
    %v197 = vld [vmem:[#allocation8 + $0xb4] sm:$0xf]
    %v198 = vld [vmem:[#allocation8 + $0xb8] sm:$0xf]
    %v199 = vld [vmem:[#allocation8 + $0xbc] sm:$0xf]
    %v248 = vunpack.c.l.b16 %v152
    %v249 = vunpack.c.l.b16 %v153
    %v250 = vunpack.c.l.b16 %v154
    %v251 = vunpack.c.l.b16 %v155
    %v252 = vunpack.c.l.b16 %v156
    %v253 = vunpack.c.l.b16 %v157
    %v254 = vunpack.c.l.b16 %v158
    %v255 = vunpack.c.l.b16 %v159
    %v256 = vunpack.c.l.b16 %v160
    %v257 = vunpack.c.l.b16 %v161
    %v258 = vunpack.c.l.b16 %v162
    %v259 = vunpack.c.l.b16 %v163
    %v260 = vunpack.c.l.b16 %v164
    %v261 = vunpack.c.l.b16 %v165
    %v262 = vunpack.c.l.b16 %v166
    %v263 = vunpack.c.l.b16 %v167
    %v264 = vunpack.c.l.b16 %v168
    %v265 = vunpack.c.l.b16 %v169
    %v266 = vunpack.c.l.b16 %v170
    %v267 = vunpack.c.l.b16 %v171
    %v268 = vunpack.c.l.b16 %v172
    %v269 = vunpack.c.l.b16 %v173
    %v270 = vunpack.c.l.b16 %v174
    %v271 = vunpack.c.l.b16 %v175
    %v272 = vunpack.c.l.b16 %v176
    %v273 = vunpack.c.l.b16 %v177
    %v274 = vunpack.c.l.b16 %v178
    %v275 = vunpack.c.l.b16 %v179
    %v276 = vunpack.c.l.b16 %v180
    %v277 = vunpack.c.l.b16 %v181
    %v278 = vunpack.c.l.b16 %v182
    %v279 = vunpack.c.l.b16 %v183
    %v280 = vunpack.c.l.b16 %v184
    %v281 = vunpack.c.l.b16 %v185
    %v282 = vunpack.c.l.b16 %v186
    %v283 = vunpack.c.l.b16 %v187
    %v284 = vunpack.c.l.b16 %v188
    %v285 = vunpack.c.l.b16 %v189
    %v286 = vunpack.c.l.b16 %v190
    %v287 = vunpack.c.l.b16 %v191
    %v288 = vunpack.c.l.b16 %v192
    %v289 = vunpack.c.l.b16 %v193
    %v290 = vunpack.c.l.b16 %v194
    %v291 = vunpack.c.l.b16 %v195
    %v292 = vunpack.c.l.b16 %v196
    %v293 = vunpack.c.l.b16 %v197
    %v294 = vunpack.c.l.b16 %v198
    %v295 = vunpack.c.l.b16 %v199
    %v296 = vpack.c.b16 %v249, %v248
    %v297 = vpack.c.b16 %v251, %v250
    %v298 = vpack.c.b16 %v253, %v252
    %v299 = vpack.c.b16 %v255, %v254
    %v300 = vpack.c.b16 %v257, %v256
    %v301 = vpack.c.b16 %v259, %v258
    %v302 = vpack.c.b16 %v261, %v260
    %v303 = vpack.c.b16 %v263, %v262
    %v304 = vpack.c.b16 %v265, %v264
    %v305 = vpack.c.b16 %v267, %v266
    %v306 = vpack.c.b16 %v269, %v268
    %v307 = vpack.c.b16 %v271, %v270
    %v308 = vpack.c.b16 %v273, %v272
    %v309 = vpack.c.b16 %v275, %v274
    %v310 = vpack.c.b16 %v277, %v276
    %v311 = vpack.c.b16 %v279, %v278
    %v312 = vpack.c.b16 %v281, %v280
    %v313 = vpack.c.b16 %v283, %v282
    %v314 = vpack.c.b16 %v285, %v284
    %v315 = vpack.c.b16 %v287, %v286
    %v316 = vpack.c.b16 %v289, %v288
    %v317 = vpack.c.b16 %v291, %v290
    %v318 = vpack.c.b16 %v293, %v292
    %v319 = vpack.c.b16 %v295, %v294
    %344 = vmatprep.subr.bf16.mxu0 0
    %345 = vmatpush1.bf16.msra.mxu0 %v296
    %346 = vmatprep.subr.bf16.mxu0 0
    %347 = vmatpush1.bf16.msra.mxu0 %v297
    %348 = vmatprep.subr.bf16.mxu0 0
    %349 = vmatpush1.bf16.msra.mxu0 %v298
    %350 = vmatprep.subr.bf16.mxu0 0
    %351 = vmatpush1.bf16.msra.mxu0 %v299
    %352 = vmatprep.subr.bf16.mxu0 0
    %353 = vmatpush1.bf16.msra.mxu0 %v300
    %354 = vmatprep.subr.bf16.mxu0 0
    %355 = vmatpush1.bf16.msra.mxu0 %v301
    %356 = vmatprep.subr.bf16.mxu0 0
    %357 = vmatpush1.bf16.msra.mxu0 %v302
    %358 = vmatprep.subr.bf16.mxu0 0
    %359 = vmatpush1.bf16.msra.mxu0 %v303
    %360 = vmatprep.subr.bf16.mxu0 0
    %361 = vmatpush1.bf16.msra.mxu0 %v304
    %362 = vmatprep.subr.bf16.mxu0 0
    %363 = vmatpush1.bf16.msra.mxu0 %v305
    %364 = vmatprep.subr.bf16.mxu0 0
    %365 = vmatpush1.bf16.msra.mxu0 %v306
    %366 = vmatprep.subr.bf16.mxu0 0
    %367 = vmatpush1.bf16.msra.mxu0 %v307
    %368 = vmatprep.subr.bf16.mxu0 0
    %369 = vmatpush1.bf16.msra.mxu0 %v308
    %370 = vmatprep.subr.bf16.mxu0 0
    %371 = vmatpush1.bf16.msra.mxu0 %v309
    %372 = vmatprep.subr.bf16.mxu0 0
    %373 = vmatpush1.bf16.msra.mxu0 %v310
    %374 = vmatprep.subr.bf16.mxu0 0
    %375 = vmatpush1.bf16.msra.mxu0 %v311
    %376 = vmatprep.mubr.bf16.mxu0 %v147
    %377 = vmatmul.mubr.bf16.gmra.mrb[0].mxu0 %v146
    %v378 = vpop.f32.mrb[0].mxu0
    %v379 = vadd.f32 0.0, %v378
    %v380 = vpop.f32.mrb[0].mxu0
    %v381 = vpop.f32.mrb[0].mxu0
    %v382 = vadd.f32 0.0, %v381
    %v383 = vpop.f32.mrb[0].mxu0
    %384 = vmatprep.mubr.bf16.mxu0 %v150
    %385 = vmatmul.mubr.bf16.gmra.mrb[0].mxu0 %v149
    %v386 = vpop.f32.mrb[0].mxu0
    %v387 = vadd.f32 0.0, %v386
    %v388 = vpop.f32.mrb[0].mxu0
    %v389 = vpop.f32.mrb[0].mxu0
    %v390 = vadd.f32 0.0, %v389
    %v391 = vpop.f32.mrb[0].mxu0
    %392 = vdwg.mxu0
    %393 = vmatprep.subr.bf16.mxu0 0
    %394 = vmatpush1.bf16.msra.mxu0 %v312
    %395 = vmatprep.subr.bf16.mxu0 0
    %396 = vmatpush1.bf16.msra.mxu0 %v313
    %397 = vmatprep.subr.bf16.mxu0 0
    %398 = vmatpush1.bf16.msra.mxu0 %v314
    %399 = vmatprep.subr.bf16.mxu0 0
    %400 = vmatpush1.bf16.msra.mxu0 %v315
    %401 = vmatprep.subr.bf16.mxu0 0
    %402 = vmatpush1.bf16.msra.mxu0 %v316
    %403 = vmatprep.subr.bf16.mxu0 0
    %404 = vmatpush1.bf16.msra.mxu0 %v317
    %405 = vmatprep.subr.bf16.mxu0 0
    %406 = vmatpush1.bf16.msra.mxu0 %v318
    %407 = vmatprep.subr.bf16.mxu0 0
    %408 = vmatpush1.bf16.msra.mxu0 %v319
    %409 = vmatprep.subr.bf16.mxu0 0
    %410 = vmatpush1.bf16.msra.mxu0 0
    %411 = vmatprep.subr.bf16.mxu0 0
    %412 = vmatpush1.bf16.msra.mxu0 0
    %413 = vmatprep.subr.bf16.mxu0 0
    %414 = vmatpush1.bf16.msra.mxu0 0
    %415 = vmatprep.subr.bf16.mxu0 0
    %416 = vmatpush1.bf16.msra.mxu0 0
    %417 = vmatprep.subr.bf16.mxu0 0
    %418 = vmatpush1.bf16.msra.mxu0 0
    %419 = vmatprep.subr.bf16.mxu0 0
    %420 = vmatpush1.bf16.msra.mxu0 0
    %421 = vmatprep.subr.bf16.mxu0 0
    %422 = vmatpush1.bf16.msra.mxu0 0
    %423 = vmatprep.subr.bf16.mxu0 0
    %424 = vmatpush1.bf16.msra.mxu0 0
    %425 = vmatprep.mubr.bf16.mxu0 0
    %426 = vmatmul.mubr.bf16.gmra.mrb[0].mxu0 %v148
    %v427 = vpop.f32.mrb[0].mxu0
    %v428 = vadd.f32 %v379, %v427
    %v429 = vpop.f32.mrb[0].mxu0
    %v430 = vpop.f32.mrb[0].mxu0
    %v431 = vadd.f32 %v382, %v430
    %v432 = vpop.f32.mrb[0].mxu0
    %433 = vmatprep.mubr.bf16.mxu0 0
    %434 = vmatmul.mubr.bf16.gmra.mrb[0].mxu0 %v151
    %v435 = vpop.f32.mrb[0].mxu0
    %v436 = vadd.f32 %v387, %v435
    %v437 = vpop.f32.mrb[0].mxu0
    %v438 = vpop.f32.mrb[0].mxu0
    %v439 = vadd.f32 %v390, %v438
    %v440 = vpop.f32.mrb[0].mxu0
    %441 = vdwg.mxu0
    %442 = vst [vmem:[#allocation2] sm:$0xff] %v428
    %443 = vst [vmem:[#allocation2 + $0x8] sm:$0xff] %v431
    %444 = vst [vmem:[#allocation2 + $0x10] sm:$0xff] %v436
    %445 = vst [vmem:[#allocation2 + $0x18] sm:$0xff] %v439
    %v446 = vld [vmem:[#allocation2] sm:$0xff]
    %v447 = vld [vmem:[#allocation2 + $0x8] sm:$0xff]
    %v448 = vld [vmem:[#allocation2 + $0x10] sm:$0xff]
    %v449 = vld [vmem:[#allocation2 + $0x18] sm:$0xff]
    %v450 = vadd.f32 %v446, %v447
    %v451 = vadd.f32 %v450, %v448
    %v452 = vadd.f32 %v451, %v449
    %v453 = vrot.slane %v452, 4
    %v454 = vadd.f32 %v452, %v453
    %v455 = vrot.slane %v454, 2
    %v456 = vadd.f32 %v454, %v455
    %v457 = vrot.slane %v456, 1
    %v458 = vadd.f32 %v456, %v457
    %v459 = vmul.f32 %v458, 0.0625
    %v460 = vmul.f32 %v446, %v446
    %v461 = vmul.f32 %v447, %v447
    %v462 = vmul.f32 %v448, %v448
    %v463 = vmul.f32 %v449, %v449
    %v464 = vadd.f32 %v460, %v461
    %v465 = vadd.f32 %v464, %v462
    %v466 = vadd.f32 %v465, %v463
    %v467 = vrot.slane %v466, 4
    %v468 = vadd.f32 %v466, %v467
    %v469 = vrot.slane %v468, 2
    %v470 = vadd.f32 %v468, %v469
    %v471 = vrot.slane %v470, 1
    %v472 = vadd.f32 %v470, %v471
    %v473 = vmul.f32 %v472, 0.0625
    %v474 = vmul.f32 %v459, %v459
    %v475 = vsub.f32 %v473, %v474
    %v476 = vmax.f32 %v475, 0.0
    %v477 = vld [vmem:[%s2] sm:$0x1]
    %v478 = vadd.f32 %v476, 1e-05
    %v479 = vrsqrt.pop %v478
    %v480 = vmul.f32 %v477, %v479
    %v481 = vld [vmem:[%s3] sm:$0x1]
    %v482 = vmul.f32 %v459, %v480
    %v483 = vsub.f32 %v481, %v482
    %v485 = vlaneseq
    %v486 = vshrl.u32 %v485, 7
    %v487 = vsub.s32 0, %v486
    %v488 = vrot.slane %v480, %v487
    %v490 = vmul.f32 %v446, %v488
    %v491 = vmul.f32 %v448, %v488
    %v493 = vlaneseq
    %v494 = vshrl.u32 %v493, 7
    %v495 = vsub.s32 0, %v494
    %v496 = vrot.slane %v483, %v495
    %v498 = vadd.f32 %v490, %v496
    %v499 = vadd.f32 %v491, %v496
    %v500 = vmax.f32 %v498, 0.0
    %v501 = vmax.f32 %v499, 0.0
    %v502 = vpack.c.bf16 %v500, %v500
    %v504 = vshrl.u32 %v502, 16
    %v506 = vrot.slane %v504, 7
    %v507 = vshll.u32 %v502, 16
    %v509 = vor.u32 %v506, %v507
    %vm511 = vcmask 1044480
    %vm512 = vsmask.f32 4354
    %vm513 = vmand %vm511, %vm512
    %v514 = vld [vmem:[#allocation4] sm:$0x1f]
    %v515 = vsel %vm513, %v509, %v514
    %516 = vst [vmem:[#allocation4] sm:$0x1f] %v515
    %v517 = vpack.c.bf16 %v501, %v501
    %v519 = vshrl.u32 %v517, 16
    %v521 = vrot.slane %v519, 7
    %v522 = vshll.u32 %v517, 16
    %v524 = vor.u32 %v521, %v522
    %v526 = vld [vmem:[#allocation4 + $0x8] sm:$0x1f]
    %v527 = vsel %vm513, %v524, %v526
    %528 = vst [vmem:[#allocation4 + $0x8] sm:$0x1f] %v527
    %v529 = vld [vmem:[#allocation4] sm:$0xf]
    %530 = vst [vmem:[#allocation3] sm:$0xf] %v529
    %v531 = vld [vmem:[#allocation4] sm:$0x1f]
    %v533 = vshrl.u32 %v531, 16
    %v535 = vshll.u32 %v531, 16
    %v537 = vrot.slane %v535, 1
    %v538 = vor.u32 %v533, %v537
    %540 = vst [vmem:[#allocation3 + $0x8] sm:$0xf] %v538
    %v541 = vld [vmem:[#allocation4] sm:$0x1e]
    %v543 = vrot.slane %v541, 1
    %545 = vst [vmem:[#allocation3 + $0x10] sm:$0xf] %v543
    %v546 = vld [vmem:[#allocation4 + $0x8] sm:$0xf]
    %547 = vst [vmem:[#allocation3 + $0x18] sm:$0xf] %v546
    %v548 = vld [vmem:[#allocation4 + $0x8] sm:$0x1f]
    %v550 = vshrl.u32 %v548, 16
    %v552 = vshll.u32 %v548, 16
    %v554 = vrot.slane %v552, 1
    %v555 = vor.u32 %v550, %v554
    %557 = vst [vmem:[#allocation3 + $0x20] sm:$0xf] %v555
    %v558 = vld [vmem:[#allocation4 + $0x8] sm:$0x1e]
    %v560 = vrot.slane %v558, 1
    %562 = vst [vmem:[#allocation3 + $0x28] sm:$0xf] %v560
    %v563 = vld [vmem:[#allocation3] sm:$0xff]
    %v564 = vld [vmem:[#allocation3 + $0x8] sm:$0xff]
    %v565 = vld [vmem:[#allocation3 + $0x10] sm:$0xff]
    %v566 = vld [vmem:[#allocation3 + $0x18] sm:$0xff]
    %v567 = vld [vmem:[#allocation3 + $0x20] sm:$0xff]
    %v568 = vld [vmem:[#allocation3 + $0x28] sm:$0xff]
    %v569 = vld [vmem:[#allocation10] sm:$0xf]
    %v570 = vld [vmem:[#allocation10 + $0x4] sm:$0xf]
    %v571 = vld [vmem:[#allocation10 + $0x8] sm:$0xf]
    %v572 = vld [vmem:[#allocation10 + $0xc] sm:$0xf]
    %v573 = vld [vmem:[#allocation10 + $0x10] sm:$0xf]
    %v574 = vld [vmem:[#allocation10 + $0x14] sm:$0xf]
    %v575 = vld [vmem:[#allocation10 + $0x18] sm:$0xf]
    %v576 = vld [vmem:[#allocation10 + $0x1c] sm:$0xf]
    %v577 = vld [vmem:[#allocation10 + $0x20] sm:$0xf]
    %v578 = vld [vmem:[#allocation10 + $0x24] sm:$0xf]
    %v579 = vld [vmem:[#allocation10 + $0x28] sm:$0xf]
    %v580 = vld [vmem:[#allocation10 + $0x2c] sm:$0xf]
    %v581 = vld [vmem:[#allocation10 + $0x30] sm:$0xf]
    %v582 = vld [vmem:[#allocation10 + $0x34] sm:$0xf]
    %v583 = vld [vmem:[#allocation10 + $0x38] sm:$0xf]
    %v584 = vld [vmem:[#allocation10 + $0x3c] sm:$0xf]
    %v585 = vld [vmem:[#allocation10 + $0x40] sm:$0xf]
    %v586 = vld [vmem:[#allocation10 + $0x44] sm:$0xf]
    %v587 = vld [vmem:[#allocation10 + $0x48] sm:$0xf]
    %v588 = vld [vmem:[#allocation10 + $0x4c] sm:$0xf]
    %v589 = vld [vmem:[#allocation10 + $0x50] sm:$0xf]
    %v590 = vld [vmem:[#allocation10 + $0x54] sm:$0xf]
    %v591 = vld [vmem:[#allocation10 + $0x58] sm:$0xf]
    %v592 = vld [vmem:[#allocation10 + $0x5c] sm:$0xf]
    %v593 = vld [vmem:[#allocation10 + $0x60] sm:$0xf]
    %v594 = vld [vmem:[#allocation10 + $0x64] sm:$0xf]
    %v595 = vld [vmem:[#allocation10 + $0x68] sm:$0xf]
    %v596 = vld [vmem:[#allocation10 + $0x6c] sm:$0xf]
    %v597 = vld [vmem:[#allocation10 + $0x70] sm:$0xf]
    %v598 = vld [vmem:[#allocation10 + $0x74] sm:$0xf]
    %v599 = vld [vmem:[#allocation10 + $0x78] sm:$0xf]
    %v600 = vld [vmem:[#allocation10 + $0x7c] sm:$0xf]
    %v601 = vld [vmem:[#allocation10 + $0x80] sm:$0xf]
    %v602 = vld [vmem:[#allocation10 + $0x84] sm:$0xf]
    %v603 = vld [vmem:[#allocation10 + $0x88] sm:$0xf]
    %v604 = vld [vmem:[#allocation10 + $0x8c] sm:$0xf]
    %v605 = vld [vmem:[#allocation10 + $0x90] sm:$0xf]
    %v606 = vld [vmem:[#allocation10 + $0x94] sm:$0xf]
    %v607 = vld [vmem:[#allocation10 + $0x98] sm:$0xf]
    %v608 = vld [vmem:[#allocation10 + $0x9c] sm:$0xf]
    %v609 = vld [vmem:[#allocation10 + $0xa0] sm:$0xf]
    %v610 = vld [vmem:[#allocation10 + $0xa4] sm:$0xf]
    %v611 = vld [vmem:[#allocation10 + $0xa8] sm:$0xf]
    %v612 = vld [vmem:[#allocation10 + $0xac] sm:$0xf]
    %v613 = vld [vmem:[#allocation10 + $0xb0] sm:$0xf]
    %v614 = vld [vmem:[#allocation10 + $0xb4] sm:$0xf]
    %v615 = vld [vmem:[#allocation10 + $0xb8] sm:$0xf]
    %v616 = vld [vmem:[#allocation10 + $0xbc] sm:$0xf]
    %v617 = vld [vmem:[%s5] sm:$0x1]
    %v619 = vlaneseq
    %v620 = vshrl.u32 %v619, 7
    %v621 = vsub.s32 0, %v620
    %v622 = vrot.slane %v617, %v621
    %v672 = vunpack.c.l.b16 %v569
    %v673 = vunpack.c.l.b16 %v570
    %v674 = vunpack.c.l.b16 %v571
    %v675 = vunpack.c.l.b16 %v572
    %v676 = vunpack.c.l.b16 %v573
    %v677 = vunpack.c.l.b16 %v574
    %v678 = vunpack.c.l.b16 %v575
    %v679 = vunpack.c.l.b16 %v576
    %v680 = vunpack.c.l.b16 %v577
    %v681 = vunpack.c.l.b16 %v578
    %v682 = vunpack.c.l.b16 %v579
    %v683 = vunpack.c.l.b16 %v580
    %v684 = vunpack.c.l.b16 %v581
    %v685 = vunpack.c.l.b16 %v582
    %v686 = vunpack.c.l.b16 %v583
    %v687 = vunpack.c.l.b16 %v584
    %v688 = vunpack.c.l.b16 %v585
    %v689 = vunpack.c.l.b16 %v586
    %v690 = vunpack.c.l.b16 %v587
    %v691 = vunpack.c.l.b16 %v588
    %v692 = vunpack.c.l.b16 %v589
    %v693 = vunpack.c.l.b16 %v590
    %v694 = vunpack.c.l.b16 %v591
    %v695 = vunpack.c.l.b16 %v592
    %v696 = vunpack.c.l.b16 %v593
    %v697 = vunpack.c.l.b16 %v594
    %v698 = vunpack.c.l.b16 %v595
    %v699 = vunpack.c.l.b16 %v596
    %v700 = vunpack.c.l.b16 %v597
    %v701 = vunpack.c.l.b16 %v598
    %v702 = vunpack.c.l.b16 %v599
    %v703 = vunpack.c.l.b16 %v600
    %v704 = vunpack.c.l.b16 %v601
    %v705 = vunpack.c.l.b16 %v602
    %v706 = vunpack.c.l.b16 %v603
    %v707 = vunpack.c.l.b16 %v604
    %v708 = vunpack.c.l.b16 %v605
    %v709 = vunpack.c.l.b16 %v606
    %v710 = vunpack.c.l.b16 %v607
    %v711 = vunpack.c.l.b16 %v608
    %v712 = vunpack.c.l.b16 %v609
    %v713 = vunpack.c.l.b16 %v610
    %v714 = vunpack.c.l.b16 %v611
    %v715 = vunpack.c.l.b16 %v612
    %v716 = vunpack.c.l.b16 %v613
    %v717 = vunpack.c.l.b16 %v614
    %v718 = vunpack.c.l.b16 %v615
    %v719 = vunpack.c.l.b16 %v616
    %v720 = vpack.c.b16 %v673, %v672
    %v721 = vpack.c.b16 %v675, %v674
    %v722 = vpack.c.b16 %v677, %v676
    %v723 = vpack.c.b16 %v679, %v678
    %v724 = vpack.c.b16 %v681, %v680
    %v725 = vpack.c.b16 %v683, %v682
    %v726 = vpack.c.b16 %v685, %v684
    %v727 = vpack.c.b16 %v687, %v686
    %v728 = vpack.c.b16 %v689, %v688
    %v729 = vpack.c.b16 %v691, %v690
    %v730 = vpack.c.b16 %v693, %v692
    %v731 = vpack.c.b16 %v695, %v694
    %v732 = vpack.c.b16 %v697, %v696
    %v733 = vpack.c.b16 %v699, %v698
    %v734 = vpack.c.b16 %v701, %v700
    %v735 = vpack.c.b16 %v703, %v702
    %v736 = vpack.c.b16 %v705, %v704
    %v737 = vpack.c.b16 %v707, %v706
    %v738 = vpack.c.b16 %v709, %v708
    %v739 = vpack.c.b16 %v711, %v710
    %v740 = vpack.c.b16 %v713, %v712
    %v741 = vpack.c.b16 %v715, %v714
    %v742 = vpack.c.b16 %v717, %v716
    %v743 = vpack.c.b16 %v719, %v718
    %768 = vmatprep.subr.bf16.mxu0 0
    %769 = vmatpush1.bf16.msra.mxu0 %v720
    %770 = vmatprep.subr.bf16.mxu0 0
    %771 = vmatpush1.bf16.msra.mxu0 %v721
    %772 = vmatprep.subr.bf16.mxu0 0
    %773 = vmatpush1.bf16.msra.mxu0 %v722
    %774 = vmatprep.subr.bf16.mxu0 0
    %775 = vmatpush1.bf16.msra.mxu0 %v723
    %776 = vmatprep.subr.bf16.mxu0 0
    %777 = vmatpush1.bf16.msra.mxu0 %v724
    %778 = vmatprep.subr.bf16.mxu0 0
    %779 = vmatpush1.bf16.msra.mxu0 %v725
    %780 = vmatprep.subr.bf16.mxu0 0
    %781 = vmatpush1.bf16.msra.mxu0 %v726
    %782 = vmatprep.subr.bf16.mxu0 0
    %783 = vmatpush1.bf16.msra.mxu0 %v727
    %784 = vmatprep.subr.bf16.mxu0 0
    %785 = vmatpush1.bf16.msra.mxu0 %v728
    %786 = vmatprep.subr.bf16.mxu0 0
    %787 = vmatpush1.bf16.msra.mxu0 %v729
    %788 = vmatprep.subr.bf16.mxu0 0
    %789 = vmatpush1.bf16.msra.mxu0 %v730
    %790 = vmatprep.subr.bf16.mxu0 0
    %791 = vmatpush1.bf16.msra.mxu0 %v731
    %792 = vmatprep.subr.bf16.mxu0 0
    %793 = vmatpush1.bf16.msra.mxu0 %v732
    %794 = vmatprep.subr.bf16.mxu0 0
    %795 = vmatpush1.bf16.msra.mxu0 %v733
    %796 = vmatprep.subr.bf16.mxu0 0
    %797 = vmatpush1.bf16.msra.mxu0 %v734
    %798 = vmatprep.subr.bf16.mxu0 0
    %799 = vmatpush1.bf16.msra.mxu0 %v735
    %800 = vmatprep.mubr.bf16.mxu0 %v564
    %801 = vmatmul.mubr.bf16.gmra.mrb[0].mxu0 %v563
    %v802 = vpop.f32.mrb[0].mxu0
    %v803 = vadd.f32 %v622, %v802
    %v804 = vpop.f32.mrb[0].mxu0
    %v805 = vpop.f32.mrb[0].mxu0
    %v806 = vpop.f32.mrb[0].mxu0
    %807 = vmatprep.mubr.bf16.mxu0 %v567
    %808 = vmatmul.mubr.bf16.gmra.mrb[0].mxu0 %v566
    %v809 = vpop.f32.mrb[0].mxu0
    %v810 = vadd.f32 %v622, %v809
    %v811 = vpop.f32.mrb[0].mxu0
    %v812 = vpop.f32.mrb[0].mxu0
    %v813 = vpop.f32.mrb[0].mxu0
    %814 = vdwg.mxu0
    %815 = vmatprep.subr.bf16.mxu0 0
    %816 = vmatpush1.bf16.msra.mxu0 %v736
    %817 = vmatprep.subr.bf16.mxu0 0
    %818 = vmatpush1.bf16.msra.mxu0 %v737
    %819 = vmatprep.subr.bf16.mxu0 0
    %820 = vmatpush1.bf16.msra.mxu0 %v738
    %821 = vmatprep.subr.bf16.mxu0 0
    %822 = vmatpush1.bf16.msra.mxu0 %v739
    %823 = vmatprep.subr.bf16.mxu0 0
    %824 = vmatpush1.bf16.msra.mxu0 %v740
    %825 = vmatprep.subr.bf16.mxu0 0
    %826 = vmatpush1.bf16.msra.mxu0 %v741
    %827 = vmatprep.subr.bf16.mxu0 0
    %828 = vmatpush1.bf16.msra.mxu0 %v742
    %829 = vmatprep.subr.bf16.mxu0 0
    %830 = vmatpush1.bf16.msra.mxu0 %v743
    %831 = vmatprep.subr.bf16.mxu0 0
    %832 = vmatpush1.bf16.msra.mxu0 0
    %833 = vmatprep.subr.bf16.mxu0 0
    %834 = vmatpush1.bf16.msra.mxu0 0
    %835 = vmatprep.subr.bf16.mxu0 0
    %836 = vmatpush1.bf16.msra.mxu0 0
    %837 = vmatprep.subr.bf16.mxu0 0
    %838 = vmatpush1.bf16.msra.mxu0 0
    %839 = vmatprep.subr.bf16.mxu0 0
    %840 = vmatpush1.bf16.msra.mxu0 0
    %841 = vmatprep.subr.bf16.mxu0 0
    %842 = vmatpush1.bf16.msra.mxu0 0
    %843 = vmatprep.subr.bf16.mxu0 0
    %844 = vmatpush1.bf16.msra.mxu0 0
    %845 = vmatprep.subr.bf16.mxu0 0
    %846 = vmatpush1.bf16.msra.mxu0 0
    %847 = vmatprep.mubr.bf16.mxu0 0
    %848 = vmatmul.mubr.bf16.gmra.mrb[0].mxu0 %v565
    %v849 = vpop.f32.mrb[0].mxu0
    %v850 = vadd.f32 %v803, %v849
    %v851 = vpop.f32.mrb[0].mxu0
    %v852 = vpop.f32.mrb[0].mxu0
    %v853 = vpop.f32.mrb[0].mxu0
    %854 = vmatprep.mubr.bf16.mxu0 0
    %855 = vmatmul.mubr.bf16.gmra.mrb[0].mxu0 %v568
    %v856 = vpop.f32.mrb[0].mxu0
    %v857 = vadd.f32 %v810, %v856
    %v858 = vpop.f32.mrb[0].mxu0
    %v859 = vpop.f32.mrb[0].mxu0
    %v860 = vpop.f32.mrb[0].mxu0
    %861 = vdwg.mxu0
    %862 = vst [vmem:[#allocation11] sm:$0xff] %v850
    %863 = vst [vmem:[#allocation11 + $0x8] sm:$0xff] %v857
    // Predicated region
    $region38: #{tpu_custom_call.1} parent=1 // pred_check
      _
    $region39: #{tpu_custom_call.1} parent=1 // pred_check_branch
      %865 = sbr.rel (0) target = $region41
    $region40: #{tpu_custom_call.1} parent=1 // pred_region
      %s867 = ssub.s32 256, 256
      %868 = vsyncadd [#allocation7], %s867
      %s869 = sshll.u32 [#allocation11], 4
      %s870 = int_to_ptr.vmem [resolvable:$true] %s869
      %875 = dma.vmem_to_hbm [thread:$0]  %s870, 256, %s6, [#allocation7], 128, 128, 8
    $region41: #{tpu_custom_call.1} parent=1 // pred_fallthru
      _
    // Predicated region
    $region42: #{tpu_custom_call.1} parent=1 // pred_check
      _
    $region43: #{tpu_custom_call.1} parent=1 // pred_check_branch
      %877 = sbr.rel (0) target = $region45
    $region44: #{tpu_custom_call.1} parent=1 // pred_region
      %878 = dma.done [#allocation7], 256
    $region45: #{tpu_custom_call.1} parent=1 // pred_fallthru
      _
    %879 = vsyncpa [#allocation6], 1
    %880 = vsyncpa [#allocation9], 1
    %881 = vsyncpa [#allocation7], 1

</llo_original>
